<compile_context>
chip_gen: v7x
topology: tpu7x:2x2x1
jax: 0.10.0
libtpu: 0.0.40
codegen_flags: <defaults>
</compile_context>

<pallas_src>
import jax
import jax.numpy as jnp
from jax.experimental import pallas as pl
from jax.experimental.pallas import tpu as pltpu


def _head_kernel(emb_ref, prob_ref,
                 w1e_ref, w1p_ref, b1_ref,
                 w2_ref, b2_ref,
                 w3_ref, b3_ref,
                 out_ref):
    # In-kernel cast: emb arrives in its HBM dtype (f32); MXU operands follow
    # the (already-cast) weight dtype. Accumulation is always f32.
    x = emb_ref[...].astype(w1e_ref.dtype)        # (TM, D)
    p = prob_ref[...]                             # (TM, 1) f32

    # Layer 1: concat([x, p]) @ W1 + b1 == x @ W1[:D] + p * W1[D] + b1
    h1 = jnp.dot(x, w1e_ref[...], preferred_element_type=jnp.float32)
    h1 = h1 + p * w1p_ref[...] + b1_ref[...]
    h1 = jnp.maximum(h1, 0.0)                     # ReLU (Dropout -> identity, eval)

    # Layer 2
    h2 = jnp.dot(h1.astype(w2_ref.dtype), w2_ref[...],
                 preferred_element_type=jnp.float32) + b2_ref[...]
    h2 = jnp.maximum(h2, 0.0)

    # Layer 3 (logits, lane-padded to a multiple of 128 for dense stores)
    out = jnp.dot(h2.astype(w3_ref.dtype), w3_ref[...],
                  preferred_element_type=jnp.float32) + b3_ref[...]
    out_ref[...] = out.astype(out_ref.dtype)


def _xla_forward(emb, prob, params, out_dtype):
    """Plain-XLA forward used below the row-count gate (tiny batches)."""
    w1e, w1p, b1, w2, b2, w3, b3 = params
    B, L, D = emb.shape
    x = emb.reshape(-1, D)
    p = prob.reshape(-1, 1)
    h = jnp.maximum(x @ w1e + p * w1p + b1, 0.0)
    h = jnp.maximum(h @ w2 + b2, 0.0)
    o = (h @ w3 + b3).astype(out_dtype)
    return o.reshape(B, L, -1)


def _round_up(x, m):
    return ((x + m - 1) // m) * m


def _choose_tm(N, tm):
    """Row-tile selection: big tiles for DMA amortization, capped so the tile
    never exceeds the row count, and >=2 grid steps whenever N allows so the
    'parallel' axis shards across both v7x TensorCores."""
    if tm is None:
        tm = 1024  # ~8 MiB VMEM @ D=768 (f32 emb x2 buf + bf16 weights); v5e-safe
    tm = min(tm, _round_up(N, 8))
    if pl.cdiv(N, tm) < 2 and N > 8:
        tm = min(tm, _round_up(pl.cdiv(N, 2), 8))
    return max(8, _round_up(tm, 8))


def concat_seg_head(emb, prob, params, *, tm=None,
                    compute_dtype=jnp.bfloat16, out_dtype=None,
                    use_pallas=None, min_rows_for_pallas=1024):
    """emb: (B, L, D), prob: (B, L) -> (B, L, num_classes).

    compute_dtype: MXU operand dtype (bf16 default; f32 for exact parity).
    out_dtype: logits dtype (defaults to emb.dtype; bf16 halves output HBM traffic).
    use_pallas: None -> auto-gate on row count; True/False -> force path.
    """
    B, L, D = emb.shape
    N = B * L
    w1e, w1p, b1, w2, b2, w3, b3 = params
    H1 = w1e.shape[1]
    H2 = w2.shape[1]
    C = w3.shape[1]
    if out_dtype is None:
        out_dtype = emb.dtype

    if use_pallas is None:
        use_pallas = N >= min_rows_for_pallas
    if not use_pallas:
        return _xla_forward(emb, prob, params, out_dtype)

    # Unpadded, uncast row-major views: the kernel DMAs these directly.
    flat_emb = emb.reshape(N, D)
    flat_prob = prob.reshape(N, 1)

    # Lane-pad the tiny logits dim to a multiple of 128 (zero weight columns)
    # so output stores are dense vst instead of 2/128-live masked stores.
    c_pad = _round_up(C, 128)
    w3_p = w3 if c_pad == C else jnp.pad(w3, ((0, 0), (0, c_pad - C)))
    b3_p = b3 if c_pad == C else jnp.pad(b3, ((0, 0), (0, c_pad - C)))

    # Only the (small, grid-invariant) weights are cast in the wrapper.
    w1e_c = w1e.astype(compute_dtype)
    w2_c = w2.astype(compute_dtype)
    w3_c = w3_p.astype(compute_dtype)
    # prob, w1p and biases stay f32 (VPU adds, negligible cost).

    tm = _choose_tm(N, tm)
    grid = (pl.cdiv(N, tm),)   # non-divisible edge block: masked output stores

    out = pl.pallas_call(
        _head_kernel,
        out_shape=jax.ShapeDtypeStruct((N, c_pad), out_dtype),
        grid_spec=pltpu.PrefetchScalarGridSpec(
            num_scalar_prefetch=0,
            grid=grid,
            in_specs=[
                pl.BlockSpec((tm, D), lambda i: (i, 0)),       # emb rows
                pl.BlockSpec((tm, 1), lambda i: (i, 0)),       # prob rows
                pl.BlockSpec((D, H1), lambda i: (0, 0)),       # W1[:D]
                pl.BlockSpec((1, H1), lambda i: (0, 0)),       # W1[D] (prob row)
                pl.BlockSpec((1, H1), lambda i: (0, 0)),       # b1
                pl.BlockSpec((H1, H2), lambda i: (0, 0)),      # W2
                pl.BlockSpec((1, H2), lambda i: (0, 0)),       # b2
                pl.BlockSpec((H2, c_pad), lambda i: (0, 0)),   # W3 (lane-padded)
                pl.BlockSpec((1, c_pad), lambda i: (0, 0)),    # b3 (lane-padded)
            ],
            out_specs=pl.BlockSpec((tm, c_pad), lambda i: (i, 0)),
        ),
        compiler_params=pltpu.CompilerParams(
            # Fully data-parallel row axis -> shards across the two TCs on v7x.
            dimension_semantics=("parallel",)),
    )(flat_emb, flat_prob, w1e_c, w1p, b1, w2_c, b2, w3_c, b3_p)

    return out[:, :C].reshape(B, L, C)


def init_params(key, embed_dim, num_classes):
    """Deterministic synthetic weights for the 3 Linear layers."""
    ks = jax.random.split(key, 6)
    H1, H2 = 256, 128
    # Full first-layer weight has shape (embed_dim + 1, H1); split into the
    # embedding part and the single "prob" row.
    w1_full = jax.random.normal(ks[0], (embed_dim + 1, H1), jnp.float32) * 0.02
    w1e = w1_full[:embed_dim]               # (D, 256)
    w1p = w1_full[embed_dim:embed_dim + 1]  # (1, 256)
    b1 = jax.random.normal(ks[1], (1, H1), jnp.float32) * 0.02
    w2 = jax.random.normal(ks[2], (H1, H2), jnp.float32) * 0.02
    b2 = jax.random.normal(ks[3], (1, H2), jnp.float32) * 0.02
    w3 = jax.random.normal(ks[4], (H2, num_classes), jnp.float32) * 0.02
    b3 = jax.random.normal(ks[5], (1, num_classes), jnp.float32) * 0.02
    return (w1e, w1p, b1, w2, b2, w3, b3)


def reference(emb, prob, params):
    """Pure-JAX reference matching the PyTorch forward (eval mode)."""
    w1e, w1p, b1, w2, b2, w3, b3 = params
    B, L, D = emb.shape
    x = emb.reshape(-1, D)
    p = prob.reshape(-1, 1)
    xc = jnp.concatenate([x, p], axis=-1)
    w1 = jnp.concatenate([w1e, w1p], axis=0)
    h = jnp.maximum(xc @ w1 + b1, 0.0)
    h = jnp.maximum(h @ w2 + b2, 0.0)
    o = h @ w3 + b3
    return o.reshape(B, L, -1)


if __name__ == "__main__":
    num_classes = 2
    key = jax.random.PRNGKey(0)
    k_emb, k_prob, k_param, k_emb2, k_prob2 = jax.random.split(key, 5)

    # Case 1: small shapes, embed_dim=128, seq=8 (N=16 rows, grid of 2 tiles).
    B, L, D = 2, 8, 128
    emb = jax.random.normal(k_emb, (B, L, D), jnp.float32)
    prob = jax.nn.sigmoid(jax.random.normal(k_prob, (B, L), jnp.float32))
    params = init_params(k_param, D, num_classes)
    ref = reference(emb, prob, params)

    # Exact-parity path: f32 MXU operands, tight tolerance.
    out_f32 = concat_seg_head(emb, prob, params,
                              compute_dtype=jnp.float32, use_pallas=True)
    out_f32 = jax.block_until_ready(out_f32)
    assert out_f32.shape == (B, L, num_classes), out_f32.shape
    assert jnp.allclose(out_f32, ref, atol=1e-5, rtol=1e-5), "f32 mismatch vs reference"

    # Default path: bf16 MXU operands (in-kernel cast), f32 accumulation.
    out_bf16 = concat_seg_head(emb, prob, params, use_pallas=True)
    out_bf16 = jax.block_until_ready(out_bf16)
    assert out_bf16.shape == (B, L, num_classes), out_bf16.shape
    assert jnp.allclose(out_bf16, ref, atol=5e-2, rtol=5e-2), "bf16 mismatch vs reference"

    # Case 2: non-divisible row count (N=21) -> partial edge block, masked stores.
    B2, L2 = 3, 7
    emb2 = jax.random.normal(k_emb2, (B2, L2, D), jnp.float32)
    prob2 = jax.nn.sigmoid(jax.random.normal(k_prob2, (B2, L2), jnp.float32))
    ref2 = reference(emb2, prob2, params)
    out2 = concat_seg_head(emb2, prob2, params,
                           compute_dtype=jnp.float32, use_pallas=True)
    out2 = jax.block_until_ready(out2)
    assert out2.shape == (B2, L2, num_classes), out2.shape
    assert jnp.allclose(out2, ref2, atol=1e-5, rtol=1e-5), "edge-block mismatch vs reference"

    print("KERNEL_OK")
</pallas_src>

<mosaic_0001>
module attributes {stable_mosaic.version = 11 : i64} {
  func.func @_head_kernel(%arg0: i32, %arg1: memref<8x128xf32, #tpu.memory_space<vmem>>, %arg2: memref<8x1xf32, #tpu.memory_space<vmem>>, %arg3: memref<128x256xf32, #tpu.memory_space<vmem>>, %arg4: memref<1x256xf32, #tpu.memory_space<vmem>>, %arg5: memref<1x256xf32, #tpu.memory_space<vmem>>, %arg6: memref<256x128xf32, #tpu.memory_space<vmem>>, %arg7: memref<1x128xf32, #tpu.memory_space<vmem>>, %arg8: memref<128x128xf32, #tpu.memory_space<vmem>>, %arg9: memref<1x128xf32, #tpu.memory_space<vmem>>, %arg10: memref<8x128xf32, #tpu.memory_space<vmem>>) attributes {dimension_semantics = [#tpu.dimension_semantics<parallel>], iteration_bounds = array<i64: 2>, scalar_prefetch = 0 : i64, scratch_operands = 0 : i64, tpu.core_type = #tpu.core_type<tc>, window_params = [{transform_indices = @transform_0, window_bounds = array<i64: 8, 128>}, {transform_indices = @transform_1, window_bounds = array<i64: 8, 1>}, {pipeline_mode = #tpu.pipeline_mode<synchronous>, transform_indices = @transform_2, window_bounds = array<i64: 128, 256>}, {pipeline_mode = #tpu.pipeline_mode<synchronous>, transform_indices = @transform_3, window_bounds = array<i64: 1, 256>}, {pipeline_mode = #tpu.pipeline_mode<synchronous>, transform_indices = @transform_4, window_bounds = array<i64: 1, 256>}, {pipeline_mode = #tpu.pipeline_mode<synchronous>, transform_indices = @transform_5, window_bounds = array<i64: 256, 128>}, {pipeline_mode = #tpu.pipeline_mode<synchronous>, transform_indices = @transform_6, window_bounds = array<i64: 1, 128>}, {pipeline_mode = #tpu.pipeline_mode<synchronous>, transform_indices = @transform_7, window_bounds = array<i64: 128, 128>}, {pipeline_mode = #tpu.pipeline_mode<synchronous>, transform_indices = @transform_8, window_bounds = array<i64: 1, 128>}, {transform_indices = @transform_9, window_bounds = array<i64: 8, 128>}]} {
    %c0 = arith.constant 0 : index
    %c0_0 = arith.constant 0 : index
    %0 = vector.load %arg1[%c0, %c0_0] : memref<8x128xf32, #tpu.memory_space<vmem>>, vector<8x128xf32>
    %c0_1 = arith.constant 0 : index
    %c0_2 = arith.constant 0 : index
    %1 = vector.load %arg2[%c0_1, %c0_2] : memref<8x1xf32, #tpu.memory_space<vmem>>, vector<8x1xf32>
    %c0_3 = arith.constant 0 : index
    %c0_4 = arith.constant 0 : index
    %2 = vector.load %arg3[%c0_3, %c0_4] : memref<128x256xf32, #tpu.memory_space<vmem>>, vector<128x256xf32>
    %cst = arith.constant dense<0.000000e+00> : vector<8x256xf32>
    %3 = tpu.matmul %0, %2, %cst {dimension_numbers = #tpu.dot_dimension_numbers<[1], [0], [0], [1], [0, 0, 1, 1], [], []>} : vector<8x128xf32>, vector<128x256xf32>, vector<8x256xf32> -> vector<8x256xf32>
    %c0_5 = arith.constant 0 : index
    %c0_6 = arith.constant 0 : index
    %4 = vector.load %arg4[%c0_5, %c0_6] : memref<1x256xf32, #tpu.memory_space<vmem>>, vector<1x256xf32>
    %5 = vector.broadcast %1 : vector<8x1xf32> to vector<8x256xf32>
    %6 = vector.broadcast %4 : vector<1x256xf32> to vector<8x256xf32>
    %7 = arith.mulf %5, %6 : vector<8x256xf32>
    %8 = arith.addf %3, %7 : vector<8x256xf32>
    %c0_7 = arith.constant 0 : index
    %c0_8 = arith.constant 0 : index
    %9 = vector.load %arg5[%c0_7, %c0_8] : memref<1x256xf32, #tpu.memory_space<vmem>>, vector<1x256xf32>
    %10 = vector.broadcast %9 : vector<1x256xf32> to vector<8x256xf32>
    %11 = arith.addf %8, %10 : vector<8x256xf32>
    %cst_9 = arith.constant 0.000000e+00 : f32
    %12 = vector.broadcast %cst_9 : f32 to vector<8x256xf32>
    %13 = arith.maximumf %11, %12 : vector<8x256xf32>
    %c0_10 = arith.constant 0 : index
    %c0_11 = arith.constant 0 : index
    %14 = vector.load %arg6[%c0_10, %c0_11] : memref<256x128xf32, #tpu.memory_space<vmem>>, vector<256x128xf32>
    %cst_12 = arith.constant dense<0.000000e+00> : vector<8x128xf32>
    %15 = tpu.matmul %13, %14, %cst_12 {dimension_numbers = #tpu.dot_dimension_numbers<[1], [0], [0], [1], [0, 0, 1, 1], [], []>} : vector<8x256xf32>, vector<256x128xf32>, vector<8x128xf32> -> vector<8x128xf32>
    %c0_13 = arith.constant 0 : index
    %c0_14 = arith.constant 0 : index
    %16 = vector.load %arg7[%c0_13, %c0_14] : memref<1x128xf32, #tpu.memory_space<vmem>>, vector<1x128xf32>
    %17 = vector.broadcast %16 : vector<1x128xf32> to vector<8x128xf32>
    %18 = arith.addf %15, %17 : vector<8x128xf32>
    %cst_15 = arith.constant 0.000000e+00 : f32
    %19 = vector.broadcast %cst_15 : f32 to vector<8x128xf32>
    %20 = arith.maximumf %18, %19 : vector<8x128xf32>
    %c0_16 = arith.constant 0 : index
    %c0_17 = arith.constant 0 : index
    %21 = vector.load %arg8[%c0_16, %c0_17] : memref<128x128xf32, #tpu.memory_space<vmem>>, vector<128x128xf32>
    %cst_18 = arith.constant dense<0.000000e+00> : vector<8x128xf32>
    %22 = tpu.matmul %20, %21, %cst_18 {dimension_numbers = #tpu.dot_dimension_numbers<[1], [0], [0], [1], [0, 0, 1, 1], [], []>} : vector<8x128xf32>, vector<128x128xf32>, vector<8x128xf32> -> vector<8x128xf32>
    %c0_19 = arith.constant 0 : index
    %c0_20 = arith.constant 0 : index
    %23 = vector.load %arg9[%c0_19, %c0_20] : memref<1x128xf32, #tpu.memory_space<vmem>>, vector<1x128xf32>
    %24 = vector.broadcast %23 : vector<1x128xf32> to vector<8x128xf32>
    %25 = arith.addf %22, %24 : vector<8x128xf32>
    %c0_21 = arith.constant 0 : index
    %c0_22 = arith.constant 0 : index
    %26 = vector.load %arg10[%c0_21, %c0_22] : memref<8x128xf32, #tpu.memory_space<vmem>>, vector<8x128xf32>
    tpu.vector_store %arg10[%c0_21, %c0_22], %25 {strides = array<i32>} : memref<8x128xf32, #tpu.memory_space<vmem>>, vector<8x128xf32>,
    return
  }
  func.func @transform_0(%arg0: i32) -> (i32, i32) {
    %c0_i32 = arith.constant 0 : i32
    %c0_i32_0 = arith.constant 0 : i32
    return %arg0, %c0_i32 : i32, i32
  }
  func.func @transform_1(%arg0: i32) -> (i32, i32) {
    %c0_i32 = arith.constant 0 : i32
    %c0_i32_0 = arith.constant 0 : i32
    return %arg0, %c0_i32 : i32, i32
  }
  func.func @transform_2(%arg0: i32) -> (i32, i32) {
    %c0_i32 = arith.constant 0 : i32
    %c0_i32_0 = arith.constant 0 : i32
    %c0_i32_1 = arith.constant 0 : i32
    return %c0_i32, %c0_i32_0 : i32, i32
  }
  func.func @transform_3(%arg0: i32) -> (i32, i32) {
    %c0_i32 = arith.constant 0 : i32
    %c0_i32_0 = arith.constant 0 : i32
    %c0_i32_1 = arith.constant 0 : i32
    return %c0_i32, %c0_i32_0 : i32, i32
  }
  func.func @transform_4(%arg0: i32) -> (i32, i32) {
    %c0_i32 = arith.constant 0 : i32
    %c0_i32_0 = arith.constant 0 : i32
    %c0_i32_1 = arith.constant 0 : i32
    return %c0_i32, %c0_i32_0 : i32, i32
  }
  func.func @transform_5(%arg0: i32) -> (i32, i32) {
    %c0_i32 = arith.constant 0 : i32
    %c0_i32_0 = arith.constant 0 : i32
    %c0_i32_1 = arith.constant 0 : i32
    return %c0_i32, %c0_i32_0 : i32, i32
  }
  func.func @transform_6(%arg0: i32) -> (i32, i32) {
    %c0_i32 = arith.constant 0 : i32
    %c0_i32_0 = arith.constant 0 : i32
    %c0_i32_1 = arith.constant 0 : i32
    return %c0_i32, %c0_i32_0 : i32, i32
  }
  func.func @transform_7(%arg0: i32) -> (i32, i32) {
    %c0_i32 = arith.constant 0 : i32
    %c0_i32_0 = arith.constant 0 : i32
    %c0_i32_1 = arith.constant 0 : i32
    return %c0_i32, %c0_i32_0 : i32, i32
  }
  func.func @transform_8(%arg0: i32) -> (i32, i32) {
    %c0_i32 = arith.constant 0 : i32
    %c0_i32_0 = arith.constant 0 : i32
    %c0_i32_1 = arith.constant 0 : i32
    return %c0_i32, %c0_i32_0 : i32, i32
  }
  func.func @transform_9(%arg0: i32) -> (i32, i32) {
    %c0_i32 = arith.constant 0 : i32
    %c0_i32_0 = arith.constant 0 : i32
    return %arg0, %c0_i32 : i32, i32
  }
}

</mosaic_0001>

<llo_original>
// kernel: tpu_custom_call.1
$region0: #{tpu_custom_call.1}
  #allocation0 [shape = 'u32[]', space=smem, size = 0x4, offset = 0x4, fixed_abs, tag = 'smem constant byte address 0x4 - core index']
  #allocation1 [shape = 'u32[144,128]{1,0:T(1,128)}', space=vmem, size = 0x12000, scoped, tag = 'internal scratch']
  %s0 = inlined_call_operand.vmem [shape: f32[16,128], index: 0, kind: input, shape index: {}]
  %s1 = inlined_call_operand.vmem [shape: f32[16,1], index: 1, kind: input, shape index: {}]
  %s2 = inlined_call_operand.hbm [shape: f32[128,256], index: 2, kind: input, shape index: {}]
  %s3 = inlined_call_operand.vmem [shape: f32[1,256], index: 3, kind: input, shape index: {}]
  %s4 = inlined_call_operand.vmem [shape: f32[1,256], index: 4, kind: input, shape index: {}]
  %s5 = inlined_call_operand.hbm [shape: f32[256,128], index: 5, kind: input, shape index: {}]
  %s6 = inlined_call_operand.vmem [shape: f32[1,128], index: 6, kind: input, shape index: {}]
  %s7 = inlined_call_operand.hbm [shape: f32[128,128], index: 7, kind: input, shape index: {}]
  %s8 = inlined_call_operand.vmem [shape: f32[1,128], index: 8, kind: input, shape index: {}]
  %s9 = inlined_call_operand.hbm [shape: f32[16,128], index: 9, kind: output, shape index: {}]
  %s10 = sld [smem:[#allocation0]]
  $region81: #{tpu_custom_call.1} parent=0
    _
  %s12 = ssub.s32 1, %s10
  %s13 = scalar_select 0, %s12, %s10
  $region1: #{tpu_custom_call.1} parent=0
    #allocation2 [shape = 'u8[131072]{0}', space=vmem, size = 0x20000, scoped, tag = 'input window, operand 2, single buffered']
    #allocation3 [shape = 's32[2]{0}', space=sflag, size = 0x8, scoped, tag = 'scoped memory for tpu_custom_call.1']
    #allocation4 [shape = 's32[2]{0}', space=sflag, size = 0x8, scoped, tag = 'scoped memory for tpu_custom_call.1']
    #allocation5 [shape = 'u8[131072]{0}', space=vmem, size = 0x20000, scoped, tag = 'input window, operand 5, single buffered']
    #allocation6 [shape = 's32[1]{0}', space=sflag, size = 0x4, scoped, tag = 'scoped memory for tpu_custom_call.1']
    #allocation7 [shape = 'u8[65536]{0}', space=vmem, size = 0x10000, scoped, tag = 'input window, operand 7, single buffered']
    #allocation8 [shape = 'u8[8192]{0}', space=vmem, size = 0x2000, scoped, tag = 'output window, operand 0']
    %14 = vsyncpa [#allocation3], 0
    %15 = vsyncpa [#allocation6], 0
    %16 = vsyncpa [#allocation4], 0
    %s17 = scalar_lea.sflag [#allocation4], 1
    %18 = vsyncpa %s17, 0
    loop: start=0, step=1, limit=4
    $region2: #{tpu_custom_call.1} parent=1 // loop_pre_header
      _
    $region3: #{tpu_custom_call.1} parent=1 // loop_header
      %s20 = sphi 0, %s24
      %p21 = scmp.ge.s32.totalorder %s20, 4
      %s30 = sphi 0, %s32
      %s33 = sphi 0, %s30
      %s34 = sphi 0, %s33
      %s50 = sphi 0, %s34
      %s56 = sphi 0, %s58
      %s59 = sphi 0, %s56
      %s60 = sphi 0, %s59
      %s76 = sphi 0, %s60
      %s80 = sphi 0, %s80
      %s82 = sphi 0, %s80
      %s83 = sphi 0, %s82
      %s97 = sphi 0, %s83
      %s101 = sphi 0, %s101
      %s103 = sphi 0, %s101
      %s104 = sphi 0, %s103
      %s118 = sphi 0, %s104
      %s122 = sphi 0, %s122
      %s124 = sphi 0, %s122
      %s125 = sphi 0, %s124
      %s139 = sphi 0, %s125
      %s143 = sphi 0, %s143
      %s145 = sphi 0, %s143
      %s146 = sphi 0, %s145
      %s160 = sphi 0, %s146
      %s164 = sphi 0, %s164
      %s166 = sphi 0, %s164
      %s167 = sphi 0, %s166
      %s181 = sphi 0, %s167
      %s185 = sphi 0, %s185
      %s187 = sphi 0, %s185
      %s188 = sphi 0, %s187
      %s202 = sphi 0, %s188
      %s206 = sphi 0, %s206
      %s208 = sphi 0, %s206
      %s209 = sphi 0, %s208
      %s223 = sphi 0, %s209
      %s229 = sphi 0, %s231
      %s232 = sphi 0, %s229
      %s233 = sphi 0, %s232
      %s249 = sphi 0, %s233
    $region4: #{tpu_custom_call.1} parent=1 // loop_header_branch
      %23 = sbr.rel (%p21) target = $region8
    $region5: #{tpu_custom_call.1} parent=1 // loop_body
      %s25 = ssub.s32 %s20, 1
      %s26 = ssub.s32 %s20, 2
      %s27 = sadd.s32 %s20, 1
      %s28 = ssub.s32 %s20, %s27
      %p29 = scmp.eq.s32.totalorder %s28, 0
      %s31 = sadd.s32 %s30, 1
      %s32 = scalar_select %p29, %s30, %s31
      %p35 = pneg %p29
      %p36 = scmp.eq.s32.totalorder %s20, 1
      %p37 = por %p35, %p36
      %p38 = scmp.ne.s32.totalorder %s30, %s33
      %p39 = scmp.eq.s32.totalorder %s20, 0
      %p40 = por %p38, %p39
      %p41 = scmp.ne.s32.totalorder %s30, %s33
      %p42 = scmp.eq.s32.totalorder %s25, 1
      %p43 = por %p41, %p42
      %p44 = scmp.ne.s32.totalorder %s33, %s34
      %p45 = scmp.eq.s32.totalorder %s25, 0
      %p46 = por %p44, %p45
      %p47 = scmp.ne.s32.totalorder %s33, %s34
      %p48 = scmp.eq.s32.totalorder %s26, 1
      %p49 = por %p47, %p48
      %p51 = scmp.ne.s32.totalorder %s34, %s50
      %p52 = scmp.eq.s32.totalorder %s26, 0
      %p53 = por %p51, %p52
      %s54 = ssub.s32 %s20, %s27
      %p55 = scmp.eq.s32.totalorder %s54, 0
      %s57 = sadd.s32 %s56, 1
      %s58 = scalar_select %p55, %s56, %s57
      %p61 = pneg %p55
      %p62 = scmp.eq.s32.totalorder %s20, 1
      %p63 = por %p61, %p62
      %p64 = scmp.ne.s32.totalorder %s56, %s59
      %p65 = scmp.eq.s32.totalorder %s20, 0
      %p66 = por %p64, %p65
      %p67 = scmp.ne.s32.totalorder %s56, %s59
      %p68 = scmp.eq.s32.totalorder %s25, 1
      %p69 = por %p67, %p68
      %p70 = scmp.ne.s32.totalorder %s59, %s60
      %p71 = scmp.eq.s32.totalorder %s25, 0
      %p72 = por %p70, %p71
      %p73 = scmp.ne.s32.totalorder %s59, %s60
      %p74 = scmp.eq.s32.totalorder %s26, 1
      %p75 = por %p73, %p74
      %p77 = scmp.ne.s32.totalorder %s60, %s76
      %p78 = scmp.eq.s32.totalorder %s26, 0
      %p79 = por %p77, %p78
      %s81 = sadd.s32 %s80, 1
      %p84 = scmp.eq.s32.totalorder %s20, 1
      %p85 = scmp.ne.s32.totalorder %s80, %s82
      %p86 = scmp.eq.s32.totalorder %s20, 0
      %p87 = por %p85, %p86
      %p88 = scmp.ne.s32.totalorder %s80, %s82
      %p89 = scmp.eq.s32.totalorder %s25, 1
      %p90 = por %p88, %p89
      %p91 = scmp.ne.s32.totalorder %s82, %s83
      %p92 = scmp.eq.s32.totalorder %s25, 0
      %p93 = por %p91, %p92
      %p94 = scmp.ne.s32.totalorder %s82, %s83
      %p95 = scmp.eq.s32.totalorder %s26, 1
      %p96 = por %p94, %p95
      %p98 = scmp.ne.s32.totalorder %s83, %s97
      %p99 = scmp.eq.s32.totalorder %s26, 0
      %p100 = por %p98, %p99
      %s102 = sadd.s32 %s101, 1
      %p105 = scmp.eq.s32.totalorder %s20, 1
      %p106 = scmp.ne.s32.totalorder %s101, %s103
      %p107 = scmp.eq.s32.totalorder %s20, 0
      %p108 = por %p106, %p107
      %p109 = scmp.ne.s32.totalorder %s101, %s103
      %p110 = scmp.eq.s32.totalorder %s25, 1
      %p111 = por %p109, %p110
      %p112 = scmp.ne.s32.totalorder %s103, %s104
      %p113 = scmp.eq.s32.totalorder %s25, 0
      %p114 = por %p112, %p113
      %p115 = scmp.ne.s32.totalorder %s103, %s104
      %p116 = scmp.eq.s32.totalorder %s26, 1
      %p117 = por %p115, %p116
      %p119 = scmp.ne.s32.totalorder %s104, %s118
      %p120 = scmp.eq.s32.totalorder %s26, 0
      %p121 = por %p119, %p120
      %s123 = sadd.s32 %s122, 1
      %p126 = scmp.eq.s32.totalorder %s20, 1
      %p127 = scmp.ne.s32.totalorder %s122, %s124
      %p128 = scmp.eq.s32.totalorder %s20, 0
      %p129 = por %p127, %p128
      %p130 = scmp.ne.s32.totalorder %s122, %s124
      %p131 = scmp.eq.s32.totalorder %s25, 1
      %p132 = por %p130, %p131
      %p133 = scmp.ne.s32.totalorder %s124, %s125
      %p134 = scmp.eq.s32.totalorder %s25, 0
      %p135 = por %p133, %p134
      %p136 = scmp.ne.s32.totalorder %s124, %s125
      %p137 = scmp.eq.s32.totalorder %s26, 1
      %p138 = por %p136, %p137
      %p140 = scmp.ne.s32.totalorder %s125, %s139
      %p141 = scmp.eq.s32.totalorder %s26, 0
      %p142 = por %p140, %p141
      %s144 = sadd.s32 %s143, 1
      %p147 = scmp.eq.s32.totalorder %s20, 1
      %p148 = scmp.ne.s32.totalorder %s143, %s145
      %p149 = scmp.eq.s32.totalorder %s20, 0
      %p150 = por %p148, %p149
      %p151 = scmp.ne.s32.totalorder %s143, %s145
      %p152 = scmp.eq.s32.totalorder %s25, 1
      %p153 = por %p151, %p152
      %p154 = scmp.ne.s32.totalorder %s145, %s146
      %p155 = scmp.eq.s32.totalorder %s25, 0
      %p156 = por %p154, %p155
      %p157 = scmp.ne.s32.totalorder %s145, %s146
      %p158 = scmp.eq.s32.totalorder %s26, 1
      %p159 = por %p157, %p158
      %p161 = scmp.ne.s32.totalorder %s146, %s160
      %p162 = scmp.eq.s32.totalorder %s26, 0
      %p163 = por %p161, %p162
      %s165 = sadd.s32 %s164, 1
      %p168 = scmp.eq.s32.totalorder %s20, 1
      %p169 = scmp.ne.s32.totalorder %s164, %s166
      %p170 = scmp.eq.s32.totalorder %s20, 0
      %p171 = por %p169, %p170
      %p172 = scmp.ne.s32.totalorder %s164, %s166
      %p173 = scmp.eq.s32.totalorder %s25, 1
      %p174 = por %p172, %p173
      %p175 = scmp.ne.s32.totalorder %s166, %s167
      %p176 = scmp.eq.s32.totalorder %s25, 0
      %p177 = por %p175, %p176
      %p178 = scmp.ne.s32.totalorder %s166, %s167
      %p179 = scmp.eq.s32.totalorder %s26, 1
      %p180 = por %p178, %p179
      %p182 = scmp.ne.s32.totalorder %s167, %s181
      %p183 = scmp.eq.s32.totalorder %s26, 0
      %p184 = por %p182, %p183
      %s186 = sadd.s32 %s185, 1
      %p189 = scmp.eq.s32.totalorder %s20, 1
      %p190 = scmp.ne.s32.totalorder %s185, %s187
      %p191 = scmp.eq.s32.totalorder %s20, 0
      %p192 = por %p190, %p191
      %p193 = scmp.ne.s32.totalorder %s185, %s187
      %p194 = scmp.eq.s32.totalorder %s25, 1
      %p195 = por %p193, %p194
      %p196 = scmp.ne.s32.totalorder %s187, %s188
      %p197 = scmp.eq.s32.totalorder %s25, 0
      %p198 = por %p196, %p197
      %p199 = scmp.ne.s32.totalorder %s187, %s188
      %p200 = scmp.eq.s32.totalorder %s26, 1
      %p201 = por %p199, %p200
      %p203 = scmp.ne.s32.totalorder %s188, %s202
      %p204 = scmp.eq.s32.totalorder %s26, 0
      %p205 = por %p203, %p204
      %s207 = sadd.s32 %s206, 1
      %p210 = scmp.eq.s32.totalorder %s20, 1
      %p211 = scmp.ne.s32.totalorder %s206, %s208
      %p212 = scmp.eq.s32.totalorder %s20, 0
      %p213 = por %p211, %p212
      %p214 = scmp.ne.s32.totalorder %s206, %s208
      %p215 = scmp.eq.s32.totalorder %s25, 1
      %p216 = por %p214, %p215
      %p217 = scmp.ne.s32.totalorder %s208, %s209
      %p218 = scmp.eq.s32.totalorder %s25, 0
      %p219 = por %p217, %p218
      %p220 = scmp.ne.s32.totalorder %s208, %s209
      %p221 = scmp.eq.s32.totalorder %s26, 1
      %p222 = por %p220, %p221
      %p224 = scmp.ne.s32.totalorder %s209, %s223
      %p225 = scmp.eq.s32.totalorder %s26, 0
      %p226 = por %p224, %p225
      %s227 = ssub.s32 %s20, %s27
      %p228 = scmp.eq.s32.totalorder %s227, 0
      %s230 = sadd.s32 %s229, 1
      %s231 = scalar_select %p228, %s229, %s230
      %p234 = pneg %p228
      %p235 = scmp.eq.s32.totalorder %s20, 1
      %p236 = por %p234, %p235
      %p237 = scmp.ne.s32.totalorder %s229, %s232
      %p238 = scmp.eq.s32.totalorder %s20, 0
      %p239 = por %p237, %p238
      %p240 = scmp.ne.s32.totalorder %s229, %s232
      %p241 = scmp.eq.s32.totalorder %s25, 1
      %p242 = por %p240, %p241
      %p243 = scmp.ne.s32.totalorder %s232, %s233
      %p244 = scmp.eq.s32.totalorder %s25, 0
      %p245 = por %p243, %p244
      %p246 = scmp.ne.s32.totalorder %s232, %s233
      %p247 = scmp.eq.s32.totalorder %s26, 1
      %p248 = por %p246, %p247
      %p250 = scmp.ne.s32.totalorder %s233, %s249
      %p251 = scmp.eq.s32.totalorder %s26, 0
      %p252 = por %p250, %p251
      %p253 = scmp.le.s32.totalorder 1, %s20
      %p254 = scmp.lt.s32.totalorder %s20, 3
      %p255 = pnand %p253, %p254
      %p256 = pneg %p255
      // Predicated region
      $region9: #{tpu_custom_call.1} parent=5 // pred_check
        _
      $region10: #{tpu_custom_call.1} parent=5 // pred_check_branch
        %258 = sbr.rel (%p255) target = $region12
      $region11: #{tpu_custom_call.1} parent=5 // pred_region
        %s259 = ssub.s32 %s20, 1
        // Predicated region
        $region13: #{tpu_custom_call.1} parent=11 // pred_check
          %p260 = pneg %p93
        $region14: #{tpu_custom_call.1} parent=11 // pred_check_branch
          %262 = sbr.rel (%p260) target = $region16
        $region15: #{tpu_custom_call.1} parent=11 // pred_region
          %s264 = ssub.s32 4096, 4096
          %265 = vsyncadd [#allocation3], %s264
          %s266 = sshll.u32 [#allocation2], 4
          %s267 = int_to_ptr.vmem [resolvable:$true] %s266
          %272 = dma.hbm_to_vmem [thread:$0]  %s2, 4096, %s267, [#allocation3], 256, 256, 16
        $region16: #{tpu_custom_call.1} parent=11 // pred_fallthru
          _
        // Predicated region
        $region17: #{tpu_custom_call.1} parent=11 // pred_check
          %p273 = pneg %p114
        $region18: #{tpu_custom_call.1} parent=11 // pred_check_branch
          %275 = sbr.rel (%p273) target = $region20
        $region19: #{tpu_custom_call.1} parent=11 // pred_region
          _
        $region20: #{tpu_custom_call.1} parent=11 // pred_fallthru
          _
        // Predicated region
        $region21: #{tpu_custom_call.1} parent=11 // pred_check
          %p276 = pneg %p135
        $region22: #{tpu_custom_call.1} parent=11 // pred_check_branch
          %278 = sbr.rel (%p276) target = $region24
        $region23: #{tpu_custom_call.1} parent=11 // pred_region
          _
        $region24: #{tpu_custom_call.1} parent=11 // pred_fallthru
          _
        // Predicated region
        $region25: #{tpu_custom_call.1} parent=11 // pred_check
          %p279 = pneg %p156
        $region26: #{tpu_custom_call.1} parent=11 // pred_check_branch
          %281 = sbr.rel (%p279) target = $region28
        $region27: #{tpu_custom_call.1} parent=11 // pred_region
          %s283 = ssub.s32 4096, 4096
          %284 = vsyncadd [#allocation6], %s283
          %s285 = sshll.u32 [#allocation5], 4
          %s286 = int_to_ptr.vmem [resolvable:$true] %s285
          %291 = dma.hbm_to_vmem [thread:$0]  %s5, 4096, %s286, [#allocation6], 128, 128, 8
        $region28: #{tpu_custom_call.1} parent=11 // pred_fallthru
          _
        // Predicated region
        $region29: #{tpu_custom_call.1} parent=11 // pred_check
          %p292 = pneg %p177
        $region30: #{tpu_custom_call.1} parent=11 // pred_check_branch
          %294 = sbr.rel (%p292) target = $region32
        $region31: #{tpu_custom_call.1} parent=11 // pred_region
          _
        $region32: #{tpu_custom_call.1} parent=11 // pred_fallthru
          _
        // Predicated region
        $region33: #{tpu_custom_call.1} parent=11 // pred_check
          %p295 = pneg %p198
        $region34: #{tpu_custom_call.1} parent=11 // pred_check_branch
          %297 = sbr.rel (%p295) target = $region36
        $region35: #{tpu_custom_call.1} parent=11 // pred_region
          %s299 = ssub.s32 2048, 2048
          %300 = vsyncadd [#allocation6], %s299
          %s301 = sshll.u32 [#allocation7], 4
          %s302 = int_to_ptr.vmem [resolvable:$true] %s301
          %307 = dma.hbm_to_vmem [thread:$0]  %s7, 2048, %s302, [#allocation6], 128, 128, 8
        $region36: #{tpu_custom_call.1} parent=11 // pred_fallthru
          _
        // Predicated region
        $region37: #{tpu_custom_call.1} parent=11 // pred_check
          %p308 = pneg %p219
        $region38: #{tpu_custom_call.1} parent=11 // pred_check_branch
          %310 = sbr.rel (%p308) target = $region40
        $region39: #{tpu_custom_call.1} parent=11 // pred_region
          _
        $region40: #{tpu_custom_call.1} parent=11 // pred_fallthru
          _
      $region12: #{tpu_custom_call.1} parent=5 // pred_fallthru
        _
      %p311 = scmp.lt.s32.totalorder %s20, 2
      // Predicated region
      $region41: #{tpu_custom_call.1} parent=5 // pred_check
        %p312 = pneg %p311
      $region42: #{tpu_custom_call.1} parent=5 // pred_check_branch
        %314 = sbr.rel (%p312) target = $region44
      $region43: #{tpu_custom_call.1} parent=5 // pred_region
        // Predicated region
        $region45: #{tpu_custom_call.1} parent=43 // pred_check
          %p315 = pneg %p40
        $region46: #{tpu_custom_call.1} parent=43 // pred_check_branch
          %317 = sbr.rel (%p315) target = $region48
        $region47: #{tpu_custom_call.1} parent=43 // pred_region
          %p318 = scmp.lt.s32.totalorder %s20, 1
          %s319 = scalar_select %p318, %s20, 1
          %s320 = smul.addr %s319, 8
          %s321 = scalar_lea.vmem %s0, %s320
        $region48: #{tpu_custom_call.1} parent=43 // pred_fallthru
          _
        // Predicated region
        $region49: #{tpu_custom_call.1} parent=43 // pred_check
          %p322 = pneg %p66
        $region50: #{tpu_custom_call.1} parent=43 // pred_check_branch
          %324 = sbr.rel (%p322) target = $region52
        $region51: #{tpu_custom_call.1} parent=43 // pred_region
          %p325 = scmp.lt.s32.totalorder %s20, 1
          %s326 = scalar_select %p325, %s20, 1
          %s327 = smul.addr %s326, 8
          %s328 = scalar_lea.vmem %s1, %s327
        $region52: #{tpu_custom_call.1} parent=43 // pred_fallthru
          _
      $region44: #{tpu_custom_call.1} parent=5 // pred_fallthru
        _
      %p329 = scmp.le.s32.totalorder 1, %s20
      %p330 = scmp.lt.s32.totalorder %s20, 3
      %p331 = pnand %p329, %p330
      %p332 = pneg %p331
      // Predicated region
      $region53: #{tpu_custom_call.1} parent=5 // pred_check
        _
      $region54: #{tpu_custom_call.1} parent=5 // pred_check_branch
        %334 = sbr.rel (%p331) target = $region56
      $region55: #{tpu_custom_call.1} parent=5 // pred_region
        %s335 = ssub.s32 %s20, 1
        // Predicated region
        $region57: #{tpu_custom_call.1} parent=55 // pred_check
          %p336 = pneg %p93
        $region58: #{tpu_custom_call.1} parent=55 // pred_check_branch
          %338 = sbr.rel (%p336) target = $region60
        $region59: #{tpu_custom_call.1} parent=55 // pred_region
          %339 = dma.done [#allocation3], 4096
        $region60: #{tpu_custom_call.1} parent=55 // pred_fallthru
          _
        // Predicated region
        $region61: #{tpu_custom_call.1} parent=55 // pred_check
          %p340 = pneg %p156
        $region62: #{tpu_custom_call.1} parent=55 // pred_check_branch
          %342 = sbr.rel (%p340) target = $region64
        $region63: #{tpu_custom_call.1} parent=55 // pred_region
          %343 = dma.done [#allocation6], 4096
        $region64: #{tpu_custom_call.1} parent=55 // pred_fallthru
          _
        // Predicated region
        $region65: #{tpu_custom_call.1} parent=55 // pred_check
          %p344 = pneg %p198
        $region66: #{tpu_custom_call.1} parent=55 // pred_check_branch
          %346 = sbr.rel (%p344) target = $region68
        $region67: #{tpu_custom_call.1} parent=55 // pred_region
          %347 = dma.done [#allocation6], 2048
        $region68: #{tpu_custom_call.1} parent=55 // pred_fallthru
          _
        %p348 = scmp.lt.s32.totalorder %s25, 1
        %s349 = scalar_select %p348, %s25, 1
        %s350 = smul.addr %s349, 8
        %s351 = scalar_lea.vmem %s0, %s350
        %p352 = pneg %p46
        %p353 = pneg %p43
        %p354 = scmp.lt.s32.totalorder %s25, 1
        %s355 = scalar_select %p354, %s25, 1
        %s356 = smul.addr %s355, 8
        %s357 = scalar_lea.vmem %s1, %s356
        %p358 = pneg %p72
        %p359 = pneg %p69
        %p360 = pneg %p93
        %p361 = pneg %p90
        %p362 = pneg %p114
        %p363 = pneg %p111
        %p364 = pneg %p135
        %p365 = pneg %p132
        %p366 = pneg %p156
        %p367 = pneg %p153
        %p368 = pneg %p177
        %p369 = pneg %p174
        %p370 = pneg %p198
        %p371 = pneg %p195
        %p372 = pneg %p219
        %p373 = pneg %p216
        %p374 = pneg %p245
        %p375 = pneg %p242
        %s376 = sand.u32 %s232, 1
        %s377 = scalar_lea.sflag [#allocation4], %s376
        %s378 = sand.u32 %s232, 1
        %s379 = smul.addr %s378, 8
        %s380 = scalar_lea.vmem [#allocation8], %s379
        %p381 = scmp.lt.s32.totalorder %s25, 1
        %s382 = scalar_select %p381, %s25, 1
        %s383 = smul.addr %s382, 8
        %s384 = scalar_lea.vmem %s0, %s383
        %p385 = scmp.lt.s32.totalorder %s25, 1
        %s386 = scalar_select %p385, %s25, 1
        %s387 = smul.addr %s386, 8
        %s388 = scalar_lea.vmem %s1, %s387
        %v389 = vld [vmem:[%s384] sm:$0xff]
        %v390 = vld [vmem:[%s388] sm:$0xff]
        %v391 = vld [vmem:[#allocation2] sm:$0xff]
        %v392 = vld [vmem:[#allocation2 + $0x8] sm:$0xff]
        %v393 = vld [vmem:[#allocation2 + $0x10] sm:$0xff]
        %v394 = vld [vmem:[#allocation2 + $0x18] sm:$0xff]
        %v395 = vld [vmem:[#allocation2 + $0x20] sm:$0xff]
        %v396 = vld [vmem:[#allocation2 + $0x28] sm:$0xff]
        %v397 = vld [vmem:[#allocation2 + $0x30] sm:$0xff]
        %v398 = vld [vmem:[#allocation2 + $0x38] sm:$0xff]
        %v399 = vld [vmem:[#allocation2 + $0x40] sm:$0xff]
        %v400 = vld [vmem:[#allocation2 + $0x48] sm:$0xff]
        %v401 = vld [vmem:[#allocation2 + $0x50] sm:$0xff]
        %v402 = vld [vmem:[#allocation2 + $0x58] sm:$0xff]
        %v403 = vld [vmem:[#allocation2 + $0x60] sm:$0xff]
        %v404 = vld [vmem:[#allocation2 + $0x68] sm:$0xff]
        %v405 = vld [vmem:[#allocation2 + $0x70] sm:$0xff]
        %v406 = vld [vmem:[#allocation2 + $0x78] sm:$0xff]
        %v407 = vld [vmem:[#allocation2 + $0x80] sm:$0xff]
        %v408 = vld [vmem:[#allocation2 + $0x88] sm:$0xff]
        %v409 = vld [vmem:[#allocation2 + $0x90] sm:$0xff]
        %v410 = vld [vmem:[#allocation2 + $0x98] sm:$0xff]
        %v411 = vld [vmem:[#allocation2 + $0xa0] sm:$0xff]
        %v412 = vld [vmem:[#allocation2 + $0xa8] sm:$0xff]
        %v413 = vld [vmem:[#allocation2 + $0xb0] sm:$0xff]
        %v414 = vld [vmem:[#allocation2 + $0xb8] sm:$0xff]
        %v415 = vld [vmem:[#allocation2 + $0xc0] sm:$0xff]
        %v416 = vld [vmem:[#allocation2 + $0xc8] sm:$0xff]
        %v417 = vld [vmem:[#allocation2 + $0xd0] sm:$0xff]
        %v418 = vld [vmem:[#allocation2 + $0xd8] sm:$0xff]
        %v419 = vld [vmem:[#allocation2 + $0xe0] sm:$0xff]
        %v420 = vld [vmem:[#allocation2 + $0xe8] sm:$0xff]
        %v421 = vld [vmem:[#allocation2 + $0xf0] sm:$0xff]
        %v422 = vld [vmem:[#allocation2 + $0xf8] sm:$0xff]
        %v423 = vld [vmem:[%s3] sm:$0x3]
        %425 = vset.pattern.permute.xlu0 0
        %426 = vperm.xlu0 %425, %v390
        %v427 = vpop.permute.xlu0 %426
        %v430 = vlaneseq
        %v431 = vshrl.u32 %v430, 7
        %v432 = vsub.s32 0, %v431
        %v433 = vrot.slane %v423, %v432
        %v434 = vlaneseq
        %v435 = vshrl.u32 %v434, 7
        %v436 = vsub.s32 1, %v435
        %v437 = vrot.slane %v423, %v436
        %v440 = vmul.f32 %v427, %v433
        %v441 = vmul.f32 %v427, %v437
        %442 = vmatprep.subr.mxu0 %v392
        %443 = vmatpush1.msra.mxu0 %v391
        %444 = vmatprep.subr.mxu0 %v394
        %445 = vmatpush1.msra.mxu0 %v393
        %446 = vmatprep.subr.mxu0 %v396
        %447 = vmatpush1.msra.mxu0 %v395
        %448 = vmatprep.subr.mxu0 %v398
        %449 = vmatpush1.msra.mxu0 %v397
        %450 = vmatprep.subr.mxu0 %v400
        %451 = vmatpush1.msra.mxu0 %v399
        %452 = vmatprep.subr.mxu0 %v402
        %453 = vmatpush1.msra.mxu0 %v401
        %454 = vmatprep.subr.mxu0 %v404
        %455 = vmatpush1.msra.mxu0 %v403
        %456 = vmatprep.subr.mxu0 %v406
        %457 = vmatpush1.msra.mxu0 %v405
        %458 = vmatprep.subr.mxu0 %v408
        %459 = vmatpush1.msra.mxu0 %v407
        %460 = vmatprep.subr.mxu0 %v410
        %461 = vmatpush1.msra.mxu0 %v409
        %462 = vmatprep.subr.mxu0 %v412
        %463 = vmatpush1.msra.mxu0 %v411
        %464 = vmatprep.subr.mxu0 %v414
        %465 = vmatpush1.msra.mxu0 %v413
        %466 = vmatprep.subr.mxu0 %v416
        %467 = vmatpush1.msra.mxu0 %v415
        %468 = vmatprep.subr.mxu0 %v418
        %469 = vmatpush1.msra.mxu0 %v417
        %470 = vmatprep.subr.mxu0 %v420
        %471 = vmatpush1.msra.mxu0 %v419
        %472 = vmatprep.subr.mxu0 %v422
        %473 = vmatpush1.msra.mxu0 %v421
        %474 = vmatprep.subr.mxu0 0.0
        %475 = vmatpush1.msra.mxu0 0.0
        %476 = vmatprep.subr.mxu0 0.0
        %477 = vmatpush1.msra.mxu0 0.0
        %478 = vmatprep.subr.mxu0 0.0
        %479 = vmatpush1.msra.mxu0 0.0
        %480 = vmatprep.subr.mxu0 0.0
        %481 = vmatpush1.msra.mxu0 0.0
        %482 = vmatprep.subr.mxu0 0.0
        %483 = vmatpush1.msra.mxu0 0.0
        %484 = vmatprep.subr.mxu0 0.0
        %485 = vmatpush1.msra.mxu0 0.0
        %486 = vmatprep.subr.mxu0 0.0
        %487 = vmatpush1.msra.mxu0 0.0
        %488 = vmatprep.subr.mxu0 0.0
        %489 = vmatpush1.msra.mxu0 0.0
        %490 = vmatprep.subr.mxu0 0.0
        %491 = vmatpush1.msra.mxu0 0.0
        %492 = vmatprep.subr.mxu0 0.0
        %493 = vmatpush1.msra.mxu0 0.0
        %494 = vmatprep.subr.mxu0 0.0
        %495 = vmatpush1.msra.mxu0 0.0
        %496 = vmatprep.subr.mxu0 0.0
        %497 = vmatpush1.msra.mxu0 0.0
        %498 = vmatprep.subr.mxu0 0.0
        %499 = vmatpush1.msra.mxu0 0.0
        %500 = vmatprep.subr.mxu0 0.0
        %501 = vmatpush1.msra.mxu0 0.0
        %502 = vmatprep.subr.mxu0 0.0
        %503 = vmatpush1.msra.mxu0 0.0
        %504 = vmatprep.subr.mxu0 0.0
        %505 = vmatpush1.msra.mxu0 0.0
        %506 = vmatprep.mubr.f32.mxu0 0.0
        %507 = vmatmul.mubr.f32.gmra.mrb[0].mxu0 %v389
        %v508 = vpop.f32.mrb[0].mxu0
        %v509 = vadd.f32 %v440, %v508
        %v510 = vpop.f32.mrb[0].mxu0
        %v511 = vadd.f32 %v441, %v510
        %512 = vdwg.mxu0
        %v513 = vld [vmem:[%s4] sm:$0x3]
        %v515 = vlaneseq
        %v516 = vshrl.u32 %v515, 7
        %v517 = vsub.s32 0, %v516
        %v518 = vrot.slane %v513, %v517
        %v519 = vlaneseq
        %v520 = vshrl.u32 %v519, 7
        %v521 = vsub.s32 1, %v520
        %v522 = vrot.slane %v513, %v521
        %v525 = vadd.f32 %v509, %v518
        %v526 = vadd.f32 %v511, %v522
        %v527 = vmax.f32 %v525, 0.0
        %v528 = vmax.f32 %v526, 0.0
        %v529 = vld [vmem:[#allocation5] sm:$0xff]
        %v530 = vld [vmem:[#allocation5 + $0x8] sm:$0xff]
        %v531 = vld [vmem:[#allocation5 + $0x10] sm:$0xff]
        %v532 = vld [vmem:[#allocation5 + $0x18] sm:$0xff]
        %v533 = vld [vmem:[#allocation5 + $0x20] sm:$0xff]
        %v534 = vld [vmem:[#allocation5 + $0x28] sm:$0xff]
        %v535 = vld [vmem:[#allocation5 + $0x30] sm:$0xff]
        %v536 = vld [vmem:[#allocation5 + $0x38] sm:$0xff]
        %v537 = vld [vmem:[#allocation5 + $0x40] sm:$0xff]
        %v538 = vld [vmem:[#allocation5 + $0x48] sm:$0xff]
        %v539 = vld [vmem:[#allocation5 + $0x50] sm:$0xff]
        %v540 = vld [vmem:[#allocation5 + $0x58] sm:$0xff]
        %v541 = vld [vmem:[#allocation5 + $0x60] sm:$0xff]
        %v542 = vld [vmem:[#allocation5 + $0x68] sm:$0xff]
        %v543 = vld [vmem:[#allocation5 + $0x70] sm:$0xff]
        %v544 = vld [vmem:[#allocation5 + $0x78] sm:$0xff]
        %v545 = vld [vmem:[#allocation5 + $0x80] sm:$0xff]
        %v546 = vld [vmem:[#allocation5 + $0x88] sm:$0xff]
        %v547 = vld [vmem:[#allocation5 + $0x90] sm:$0xff]
        %v548 = vld [vmem:[#allocation5 + $0x98] sm:$0xff]
        %v549 = vld [vmem:[#allocation5 + $0xa0] sm:$0xff]
        %v550 = vld [vmem:[#allocation5 + $0xa8] sm:$0xff]
        %v551 = vld [vmem:[#allocation5 + $0xb0] sm:$0xff]
        %v552 = vld [vmem:[#allocation5 + $0xb8] sm:$0xff]
        %v553 = vld [vmem:[#allocation5 + $0xc0] sm:$0xff]
        %v554 = vld [vmem:[#allocation5 + $0xc8] sm:$0xff]
        %v555 = vld [vmem:[#allocation5 + $0xd0] sm:$0xff]
        %v556 = vld [vmem:[#allocation5 + $0xd8] sm:$0xff]
        %v557 = vld [vmem:[#allocation5 + $0xe0] sm:$0xff]
        %v558 = vld [vmem:[#allocation5 + $0xe8] sm:$0xff]
        %v559 = vld [vmem:[#allocation5 + $0xf0] sm:$0xff]
        %v560 = vld [vmem:[#allocation5 + $0xf8] sm:$0xff]
        %v561 = vld [vmem:[%s6] sm:$0x1]
        %v563 = vlaneseq
        %v564 = vshrl.u32 %v563, 7
        %v565 = vsub.s32 0, %v564
        %v566 = vrot.slane %v561, %v565
        %568 = vmatprep.subr.mxu0 0.0
        %569 = vmatpush1.msra.mxu0 %v529
        %570 = vmatprep.subr.mxu0 0.0
        %571 = vmatpush1.msra.mxu0 %v530
        %572 = vmatprep.subr.mxu0 0.0
        %573 = vmatpush1.msra.mxu0 %v531
        %574 = vmatprep.subr.mxu0 0.0
        %575 = vmatpush1.msra.mxu0 %v532
        %576 = vmatprep.subr.mxu0 0.0
        %577 = vmatpush1.msra.mxu0 %v533
        %578 = vmatprep.subr.mxu0 0.0
        %579 = vmatpush1.msra.mxu0 %v534
        %580 = vmatprep.subr.mxu0 0.0
        %581 = vmatpush1.msra.mxu0 %v535
        %582 = vmatprep.subr.mxu0 0.0
        %583 = vmatpush1.msra.mxu0 %v536
        %584 = vmatprep.subr.mxu0 0.0
        %585 = vmatpush1.msra.mxu0 %v537
        %586 = vmatprep.subr.mxu0 0.0
        %587 = vmatpush1.msra.mxu0 %v538
        %588 = vmatprep.subr.mxu0 0.0
        %589 = vmatpush1.msra.mxu0 %v539
        %590 = vmatprep.subr.mxu0 0.0
        %591 = vmatpush1.msra.mxu0 %v540
        %592 = vmatprep.subr.mxu0 0.0
        %593 = vmatpush1.msra.mxu0 %v541
        %594 = vmatprep.subr.mxu0 0.0
        %595 = vmatpush1.msra.mxu0 %v542
        %596 = vmatprep.subr.mxu0 0.0
        %597 = vmatpush1.msra.mxu0 %v543
        %598 = vmatprep.subr.mxu0 0.0
        %599 = vmatpush1.msra.mxu0 %v544
        %600 = vmatprep.subr.mxu0 0.0
        %601 = vmatpush1.msra.mxu0 %v545
        %602 = vmatprep.subr.mxu0 0.0
        %603 = vmatpush1.msra.mxu0 %v546
        %604 = vmatprep.subr.mxu0 0.0
        %605 = vmatpush1.msra.mxu0 %v547
        %606 = vmatprep.subr.mxu0 0.0
        %607 = vmatpush1.msra.mxu0 %v548
        %608 = vmatprep.subr.mxu0 0.0
        %609 = vmatpush1.msra.mxu0 %v549
        %610 = vmatprep.subr.mxu0 0.0
        %611 = vmatpush1.msra.mxu0 %v550
        %612 = vmatprep.subr.mxu0 0.0
        %613 = vmatpush1.msra.mxu0 %v551
        %614 = vmatprep.subr.mxu0 0.0
        %615 = vmatpush1.msra.mxu0 %v552
        %616 = vmatprep.subr.mxu0 0.0
        %617 = vmatpush1.msra.mxu0 %v553
        %618 = vmatprep.subr.mxu0 0.0
        %619 = vmatpush1.msra.mxu0 %v554
        %620 = vmatprep.subr.mxu0 0.0
        %621 = vmatpush1.msra.mxu0 %v555
        %622 = vmatprep.subr.mxu0 0.0
        %623 = vmatpush1.msra.mxu0 %v556
        %624 = vmatprep.subr.mxu0 0.0
        %625 = vmatpush1.msra.mxu0 %v557
        %626 = vmatprep.subr.mxu0 0.0
        %627 = vmatpush1.msra.mxu0 %v558
        %628 = vmatprep.subr.mxu0 0.0
        %629 = vmatpush1.msra.mxu0 %v559
        %630 = vmatprep.subr.mxu0 0.0
        %631 = vmatpush1.msra.mxu0 %v560
        %632 = vmatprep.mubr.f32.mxu0 %v528
        %633 = vmatmul.mubr.f32.gmra.mrb[0].mxu0 %v527
        %v634 = vpop.f32.mrb[0].mxu0
        %v635 = vadd.f32 %v566, %v634
        %v636 = vpop.f32.mrb[0].mxu0
        %637 = vdwg.mxu0
        %v638 = vmax.f32 %v635, 0.0
        %v639 = vld [vmem:[#allocation7] sm:$0xff]
        %v640 = vld [vmem:[#allocation7 + $0x8] sm:$0xff]
        %v641 = vld [vmem:[#allocation7 + $0x10] sm:$0xff]
        %v642 = vld [vmem:[#allocation7 + $0x18] sm:$0xff]
        %v643 = vld [vmem:[#allocation7 + $0x20] sm:$0xff]
        %v644 = vld [vmem:[#allocation7 + $0x28] sm:$0xff]
        %v645 = vld [vmem:[#allocation7 + $0x30] sm:$0xff]
        %v646 = vld [vmem:[#allocation7 + $0x38] sm:$0xff]
        %v647 = vld [vmem:[#allocation7 + $0x40] sm:$0xff]
        %v648 = vld [vmem:[#allocation7 + $0x48] sm:$0xff]
        %v649 = vld [vmem:[#allocation7 + $0x50] sm:$0xff]
        %v650 = vld [vmem:[#allocation7 + $0x58] sm:$0xff]
        %v651 = vld [vmem:[#allocation7 + $0x60] sm:$0xff]
        %v652 = vld [vmem:[#allocation7 + $0x68] sm:$0xff]
        %v653 = vld [vmem:[#allocation7 + $0x70] sm:$0xff]
        %v654 = vld [vmem:[#allocation7 + $0x78] sm:$0xff]
        %v655 = vld [vmem:[%s8] sm:$0x1]
        %v657 = vlaneseq
        %v658 = vshrl.u32 %v657, 7
        %v659 = vsub.s32 0, %v658
        %v660 = vrot.slane %v655, %v659
        %662 = vmatprep.subr.mxu0 0.0
        %663 = vmatpush1.msra.mxu0 %v639
        %664 = vmatprep.subr.mxu0 0.0
        %665 = vmatpush1.msra.mxu0 %v640
        %666 = vmatprep.subr.mxu0 0.0
        %667 = vmatpush1.msra.mxu0 %v641
        %668 = vmatprep.subr.mxu0 0.0
        %669 = vmatpush1.msra.mxu0 %v642
        %670 = vmatprep.subr.mxu0 0.0
        %671 = vmatpush1.msra.mxu0 %v643
        %672 = vmatprep.subr.mxu0 0.0
        %673 = vmatpush1.msra.mxu0 %v644
        %674 = vmatprep.subr.mxu0 0.0
        %675 = vmatpush1.msra.mxu0 %v645
        %676 = vmatprep.subr.mxu0 0.0
        %677 = vmatpush1.msra.mxu0 %v646
        %678 = vmatprep.subr.mxu0 0.0
        %679 = vmatpush1.msra.mxu0 %v647
        %680 = vmatprep.subr.mxu0 0.0
        %681 = vmatpush1.msra.mxu0 %v648
        %682 = vmatprep.subr.mxu0 0.0
        %683 = vmatpush1.msra.mxu0 %v649
        %684 = vmatprep.subr.mxu0 0.0
        %685 = vmatpush1.msra.mxu0 %v650
        %686 = vmatprep.subr.mxu0 0.0
        %687 = vmatpush1.msra.mxu0 %v651
        %688 = vmatprep.subr.mxu0 0.0
        %689 = vmatpush1.msra.mxu0 %v652
        %690 = vmatprep.subr.mxu0 0.0
        %691 = vmatpush1.msra.mxu0 %v653
        %692 = vmatprep.subr.mxu0 0.0
        %693 = vmatpush1.msra.mxu0 %v654
        %694 = vmatprep.subr.mxu0 0.0
        %695 = vmatpush1.msra.mxu0 0.0
        %696 = vmatprep.subr.mxu0 0.0
        %697 = vmatpush1.msra.mxu0 0.0
        %698 = vmatprep.subr.mxu0 0.0
        %699 = vmatpush1.msra.mxu0 0.0
        %700 = vmatprep.subr.mxu0 0.0
        %701 = vmatpush1.msra.mxu0 0.0
        %702 = vmatprep.subr.mxu0 0.0
        %703 = vmatpush1.msra.mxu0 0.0
        %704 = vmatprep.subr.mxu0 0.0
        %705 = vmatpush1.msra.mxu0 0.0
        %706 = vmatprep.subr.mxu0 0.0
        %707 = vmatpush1.msra.mxu0 0.0
        %708 = vmatprep.subr.mxu0 0.0
        %709 = vmatpush1.msra.mxu0 0.0
        %710 = vmatprep.subr.mxu0 0.0
        %711 = vmatpush1.msra.mxu0 0.0
        %712 = vmatprep.subr.mxu0 0.0
        %713 = vmatpush1.msra.mxu0 0.0
        %714 = vmatprep.subr.mxu0 0.0
        %715 = vmatpush1.msra.mxu0 0.0
        %716 = vmatprep.subr.mxu0 0.0
        %717 = vmatpush1.msra.mxu0 0.0
        %718 = vmatprep.subr.mxu0 0.0
        %719 = vmatpush1.msra.mxu0 0.0
        %720 = vmatprep.subr.mxu0 0.0
        %721 = vmatpush1.msra.mxu0 0.0
        %722 = vmatprep.subr.mxu0 0.0
        %723 = vmatpush1.msra.mxu0 0.0
        %724 = vmatprep.subr.mxu0 0.0
        %725 = vmatpush1.msra.mxu0 0.0
        %726 = vmatprep.mubr.f32.mxu0 0.0
        %727 = vmatmul.mubr.f32.gmra.mrb[0].mxu0 %v638
        %v728 = vpop.f32.mrb[0].mxu0
        %v729 = vadd.f32 %v660, %v728
        %v730 = vpop.f32.mrb[0].mxu0
        %731 = vdwg.mxu0
        %732 = vst [vmem:[%s380] sm:$0xff] %v729
        %s733 = sand.u32 %s232, 1
        %s734 = scalar_lea.sflag [#allocation4], %s733
        %s735 = sand.u32 %s232, 1
        %s736 = smul.addr %s735, 8
        %s737 = scalar_lea.vmem [#allocation8], %s736
        // Predicated region
        $region69: #{tpu_custom_call.1} parent=55 // pred_check
          %p738 = pneg %p242
        $region70: #{tpu_custom_call.1} parent=55 // pred_check_branch
          %740 = sbr.rel (%p738) target = $region72
        $region71: #{tpu_custom_call.1} parent=55 // pred_region
          %s742 = ssub.s32 128, 128
          %743 = vsyncadd %s734, %s742
          %s744 = smul.addr %s25, 128
          %s745 = scalar_lea.hbm %s9, %s744
          %s747 = sshll.u32 %s737, 4
          %s748 = int_to_ptr.vmem [resolvable:$true] %s747
          %750 = dma.vmem_to_hbm [thread:$0]  %s748, 128, %s745, %s734
        $region72: #{tpu_custom_call.1} parent=55 // pred_fallthru
          _
      $region56: #{tpu_custom_call.1} parent=5 // pred_fallthru
        _
      %p751 = scmp.le.s32.totalorder 2, %s20
      // Predicated region
      $region73: #{tpu_custom_call.1} parent=5 // pred_check
        %p752 = pneg %p751
      $region74: #{tpu_custom_call.1} parent=5 // pred_check_branch
        %754 = sbr.rel (%p752) target = $region76
      $region75: #{tpu_custom_call.1} parent=5 // pred_region
        %s755 = ssub.s32 %s20, 2
        // Predicated region
        $region77: #{tpu_custom_call.1} parent=75 // pred_check
          %p756 = pneg %p248
        $region78: #{tpu_custom_call.1} parent=75 // pred_check_branch
          %758 = sbr.rel (%p756) target = $region80
        $region79: #{tpu_custom_call.1} parent=75 // pred_region
          %s759 = sand.u32 %s233, 1
          %s760 = scalar_lea.sflag [#allocation4], %s759
          %s761 = sand.u32 %s233, 1
          %s762 = smul.addr %s761, 8
          %s763 = scalar_lea.vmem [#allocation8], %s762
          %764 = dma.done %s760, 128
        $region80: #{tpu_custom_call.1} parent=75 // pred_fallthru
          _
      $region76: #{tpu_custom_call.1} parent=5 // pred_fallthru
        _
    $region6: #{tpu_custom_call.1} parent=1 // loop_footer
      %s24 = sadd.s32 1, %s20
    $region7: #{tpu_custom_call.1} parent=1 // loop_footer_branch
      %19 = sbr.rel target = $region3
    $region8: #{tpu_custom_call.1} parent=1 // loop_exit
      _
    %765 = vsyncpa [#allocation3], 1
    %s766 = scalar_lea.sflag [#allocation3], 1
    %767 = vsyncpa %s766, 1
    %768 = vsyncpa [#allocation6], 1
    %769 = vsyncpa [#allocation4], 1
    %s770 = scalar_lea.sflag [#allocation4], 1
    %771 = vsyncpa %s770, 1

</llo_original>
